<compile_context>
chip_gen: v6e
topology: v6e:2x2x1
jax: 0.10.0
libtpu: 0.0.40
codegen_flags: <defaults>
</compile_context>

<pallas_src>
import math

import jax
import jax.numpy as jnp
from jax.experimental import pallas as pl
from jax.experimental.pallas import tpu as pltpu


# Padded VMEM budget for all (double-buffered) blocks, and the explicit
# scoped-VMEM limit handed to Mosaic.  40 MiB is safe on every generation
# (v5e/v6e: 128 MiB physical; v7x: 64 MiB physical per TC) and well above
# v5e's 16 MiB default, which the padded footprint would otherwise exceed.
_BLOCK_BUDGET_BYTES = 30 << 20
_VMEM_LIMIT_BYTES = 40 << 20


# --------------------------------------------------------------------------
# Kernel: pure tiled elementwise add in fp32 (x block + broadcast PE block).
# Works for both blocking layouts:
#   flattened: x (B, TN)      + pe (1, TN)
#   seq-tiled: x (1, TM, D)   + pe (TM, D)
# --------------------------------------------------------------------------
def _pe_add_kernel(x_ref, pe_ref, o_ref):
    x = x_ref[...].astype(jnp.float32)
    o_ref[...] = (x + pe_ref[...]).astype(o_ref.dtype)


# --------------------------------------------------------------------------
# Host-side helpers.
# --------------------------------------------------------------------------
def _build_pe_table(vocab_size: int, d_model: int) -> jax.Array:
    """Exact replica of the PyTorch buffer: pe[v, 0::2]=sin, pe[v, 1::2]=cos."""
    position = jnp.arange(vocab_size, dtype=jnp.float32)[:, None]              # [V, 1]
    div_term = jnp.exp(
        jnp.arange(0, d_model, 2, dtype=jnp.float32) * (-math.log(10000.0) / d_model)
    )                                                                          # [D/2]
    angle = position * div_term                                                # [V, D/2]
    # Interleave (sin, cos) pairs -> columns [sin0, cos0, sin1, cos1, ...]
    pe = jnp.stack([jnp.sin(angle), jnp.cos(angle)], axis=-1).reshape(vocab_size, d_model)
    return pe.astype(jnp.float32)


def _choose_lane_tile(n_rows: int, flat: int, x_itemsize: int, out_itemsize: int) -> int:
    """Lane-tile length for the flattened (n_rows, flat) layout.

    Accounts for (8,128) sublane padding: x/out blocks occupy ceil(B/8)*8
    sublanes, the (1, TN) fp32 PE block occupies 8.  All blocks are
    double-buffered by the pipeline."""
    if flat <= 128:
        return flat
    padded_rows = ((n_rows + 7) // 8) * 8
    per_col = 2 * padded_rows * (x_itemsize + out_itemsize) + 2 * 8 * 4
    tn = _BLOCK_BUDGET_BYTES // per_col
    tn = max(128, (tn // 128) * 128)                  # lane-dense: multiple of 128
    return int(min(tn, flat))


def _choose_seq_tile(seq: int, d: int, x_itemsize: int, out_itemsize: int) -> int:
    """Sequence-tile length for the (1, TM, D) layout (D % 128 == 0: no lane
    padding; TM is the sublane dim, kept a multiple of 8)."""
    per_row = 2 * d * (x_itemsize + out_itemsize + 4)   # x + out + fp32 PE, double-buffered
    tm = _BLOCK_BUDGET_BYTES // per_row
    tm = max(8, (tm // 8) * 8)
    return int(min(tm, seq))


def positional_encoding(x: jax.Array, vocab_size: int, *, _max_tile: int | None = None) -> jax.Array:
    """x: [B, S, D]. Returns x + sinusoidal PE (dtype promoted with the fp32 buffer,
    matching the PyTorch module).  `_max_tile` is a test-only tile-size cap."""
    B, S, D = x.shape
    assert S <= vocab_size, "sequence length must not exceed vocab_size"
    assert D % 2 == 0, "d_model must be even (as required by the PyTorch module)"

    # Constant module buffer (fp32), computed once outside the kernel.
    pe = _build_pe_table(vocab_size, D)[:S]                       # [S, D] fp32

    out_dtype = jnp.promote_types(x.dtype, jnp.float32)           # PyTorch promotion
    x_isz = jnp.dtype(x.dtype).itemsize
    o_isz = jnp.dtype(out_dtype).itemsize
    alias = {0: 0} if out_dtype == x.dtype else {}                # in-place-able add

    compiler_params_1d = pltpu.CompilerParams(
        dimension_semantics=("parallel",), vmem_limit_bytes=_VMEM_LIMIT_BYTES)
    compiler_params_2d = pltpu.CompilerParams(
        dimension_semantics=("parallel", "arbitrary"), vmem_limit_bytes=_VMEM_LIMIT_BYTES)

    use_seq_tiled = (D % 128 == 0) and (B % 8 != 0)

    if use_seq_tiled:
        # [B, S, D] blocked (1, TM, D); grid (seq_tiles, B), batch innermost so
        # the (TM, D) PE block is DMA'd once per seq tile and reused across B.
        tm = _choose_seq_tile(S, D, x_isz, o_isz)
        if _max_tile is not None:
            tm = min(tm, _max_tile)
        grid = (pl.cdiv(S, tm), B)
        out = pl.pallas_call(
            _pe_add_kernel,
            out_shape=jax.ShapeDtypeStruct((B, S, D), out_dtype),
            grid=grid,
            in_specs=[
                pl.BlockSpec((1, tm, D), lambda t, b: (b, t, 0)),   # x tile
                pl.BlockSpec((tm, D), lambda t, b: (t, 0)),         # PE tile (reused over B)
            ],
            out_specs=pl.BlockSpec((1, tm, D), lambda t, b: (b, t, 0)),
            input_output_aliases=alias,
            compiler_params=compiler_params_2d,
        )(x, pe)
        return out

    # Flattened lane-dense layout: [B, S*D]; PE broadcast across the batch rows.
    flat = S * D
    x2 = x.reshape(B, flat)
    pe2 = pe.reshape(1, flat)

    tn = _choose_lane_tile(B, flat, x_isz, o_isz)
    if _max_tile is not None:
        tn = min(tn, _max_tile)
    grid = (pl.cdiv(flat, tn),)

    out = pl.pallas_call(
        _pe_add_kernel,
        out_shape=jax.ShapeDtypeStruct((B, flat), out_dtype),
        grid=grid,
        in_specs=[
            pl.BlockSpec((B, tn), lambda j: (0, j)),                # x tile
            pl.BlockSpec((1, tn), lambda j: (0, j)),                # PE tile (shared over B)
        ],
        out_specs=pl.BlockSpec((B, tn), lambda j: (0, j)),
        input_output_aliases=alias,
        compiler_params=compiler_params_1d,
    )(x2, pe2)
    return out.reshape(B, S, D)


# --------------------------------------------------------------------------
# Plain-JAX reference (verbatim port of the PyTorch module) for verification.
# --------------------------------------------------------------------------
def _reference_pe(x: jax.Array, vocab_size: int) -> jax.Array:
    B, S, D = x.shape
    position = jnp.arange(vocab_size, dtype=jnp.float32)[:, None]              # [V, 1]
    div_term = jnp.exp(
        jnp.arange(0, D, 2, dtype=jnp.float32) * (-math.log(10000.0) / D)
    )                                                                          # [D/2]
    pe = jnp.zeros((vocab_size, D), dtype=jnp.float32)
    pe = pe.at[:, 0::2].set(jnp.sin(position * div_term))
    pe = pe.at[:, 1::2].set(jnp.cos(position * div_term))
    pe = pe[None, :, :]                                                        # [1, V, D]
    return x + pe[:, :S, :]


if __name__ == "__main__":
    root_key = jax.random.PRNGKey(0)

    def _check(B, S, D, vocab_size, fold, max_tile=None):
        key = jax.random.fold_in(root_key, fold)
        x = jax.random.normal(key, (B, S, D), dtype=jnp.float32)
        out = jax.block_until_ready(positional_encoding(x, vocab_size, _max_tile=max_tile))
        ref = _reference_pe(x, vocab_size)
        assert out.shape == ref.shape and out.dtype == ref.dtype
        assert jnp.allclose(out, ref, atol=1e-5, rtol=1e-5), (
            f"mismatch vs reference for shape ({B},{S},{D})")

    # Module-default small shape (d_model=32, vocab_size=16): single-tile flattened path.
    _check(B=2, S=8, D=32, vocab_size=16, fold=0)
    # Flattened path, multi-tile with a partial last lane tile (flat=216, tn=128).
    _check(B=3, S=9, D=24, vocab_size=16, fold=1, max_tile=128)
    # Flattened path, grid >= 4 (flat=640, tn=128 -> 5 tiles), exercises pipelining.
    _check(B=2, S=40, D=16, vocab_size=64, fold=2, max_tile=128)
    # Seq-tiled 3-D path (D % 128 == 0, B < 8) with a partial last seq tile (grid (3, 2)).
    _check(B=2, S=20, D=128, vocab_size=32, fold=3, max_tile=8)

    print("KERNEL_OK")
</pallas_src>

<mosaic_0001>
module attributes {stable_mosaic.version = 11 : i64} {
  func.func @_pe_add_kernel(%arg0: i32, %arg1: memref<2x256xf32, #tpu.memory_space<vmem>>, %arg2: memref<1x256xf32, #tpu.memory_space<vmem>>, %arg3: memref<2x256xf32, #tpu.memory_space<vmem>>) attributes {dimension_semantics = [#tpu.dimension_semantics<parallel>], iteration_bounds = array<i64: 1>, scalar_prefetch = 0 : i64, scratch_operands = 0 : i64, tpu.core_type = #tpu.core_type<tc>, window_params = [{transform_indices = @transform_0, window_bounds = array<i64: 2, 256>}, {transform_indices = @transform_1, window_bounds = array<i64: 1, 256>}, {transform_indices = @transform_2, window_bounds = array<i64: 2, 256>}]} {
    %c0 = arith.constant 0 : index
    %c0_0 = arith.constant 0 : index
    %0 = vector.load %arg1[%c0, %c0_0] : memref<2x256xf32, #tpu.memory_space<vmem>>, vector<2x256xf32>
    %c0_1 = arith.constant 0 : index
    %c0_2 = arith.constant 0 : index
    %1 = vector.load %arg2[%c0_1, %c0_2] : memref<1x256xf32, #tpu.memory_space<vmem>>, vector<1x256xf32>
    %2 = vector.broadcast %1 : vector<1x256xf32> to vector<2x256xf32>
    %3 = arith.addf %0, %2 : vector<2x256xf32>
    %c0_3 = arith.constant 0 : index
    %c0_4 = arith.constant 0 : index
    %4 = vector.load %arg3[%c0_3, %c0_4] : memref<2x256xf32, #tpu.memory_space<vmem>>, vector<2x256xf32>
    tpu.vector_store %arg3[%c0_3, %c0_4], %3 {strides = array<i32>} : memref<2x256xf32, #tpu.memory_space<vmem>>, vector<2x256xf32>,
    return
  }
  func.func @transform_0(%arg0: i32) -> (i32, i32) {
    %c0_i32 = arith.constant 0 : i32
    %c0_i32_0 = arith.constant 0 : i32
    return %c0_i32, %arg0 : i32, i32
  }
  func.func @transform_1(%arg0: i32) -> (i32, i32) {
    %c0_i32 = arith.constant 0 : i32
    %c0_i32_0 = arith.constant 0 : i32
    return %c0_i32, %arg0 : i32, i32
  }
  func.func @transform_2(%arg0: i32) -> (i32, i32) {
    %c0_i32 = arith.constant 0 : i32
    %c0_i32_0 = arith.constant 0 : i32
    return %c0_i32, %arg0 : i32, i32
  }
}

</mosaic_0001>

<llo_original>
// kernel: tpu_custom_call.1
$region0: #{tpu_custom_call.1}
  #allocation0 [shape = 'u32[]', space=smem, size = 0x4, offset = 0x4, fixed_abs, tag = 'smem constant byte address 0x4 - core index']
  #allocation1 [shape = 'u32[144,128]{1,0:T(1,128)}', space=vmem, size = 0x12000, scoped, tag = 'internal scratch']
  %s0 = inlined_call_operand.hbm [shape: f32[2,256], index: 0, kind: input, shape index: {}, may-alias: {0,2}]
  %s1 = inlined_call_operand.vmem [shape: f32[1,256], index: 1, kind: input, shape index: {}]
  %s2 = inlined_call_operand.hbm [shape: f32[2,256], index: 2, kind: output, shape index: {}, may-alias: {0,2}]
  %s3 = sld [smem:[#allocation0]]
  $region22: #{tpu_custom_call.1} parent=0
    _
  %s5 = ssub.s32 1, %s3
  %s6 = scalar_select 0, %s5, %s3
  $region1: #{tpu_custom_call.1} parent=0
    #allocation2 [shape = 'u8[2048]{0}', space=vmem, size = 0x800, scoped, tag = 'input window, operand 0, single buffered']
    #allocation3 [shape = 's32[1]{0}', space=sflag, size = 0x4, scoped, tag = 'scoped memory for tpu_custom_call.1']
    #allocation4 [shape = 's32[1]{0}', space=sflag, size = 0x4, scoped, tag = 'scoped memory for tpu_custom_call.1']
    #allocation5 [shape = 'u8[2048]{0}', space=vmem, size = 0x800, scoped, tag = 'output window, operand 0, single buffered']
    %7 = vsyncpa [#allocation3], 0
    %8 = vsyncpa [#allocation4], 0
    // Predicated region
    $region2: #{tpu_custom_call.1} parent=1 // pred_check
      _
    $region3: #{tpu_custom_call.1} parent=1 // pred_check_branch
      %10 = sbr.rel (0) target = $region5
    $region4: #{tpu_custom_call.1} parent=1 // pred_region
      %s12 = ssub.s32 64, 64
      %13 = vsyncadd [#allocation3], %s12
      %s15 = sshll.u32 [#allocation2], 4
      %s16 = int_to_ptr.vmem [resolvable:$true] %s15
      %18 = dma.hbm_to_vmem [thread:$0]  %s0, 64, %s16, [#allocation3]
    $region5: #{tpu_custom_call.1} parent=1 // pred_fallthru
      _
    // Predicated region
    $region6: #{tpu_custom_call.1} parent=1 // pred_check
      _
    $region7: #{tpu_custom_call.1} parent=1 // pred_check_branch
      %20 = sbr.rel (0) target = $region9
    $region8: #{tpu_custom_call.1} parent=1 // pred_region
      _
    $region9: #{tpu_custom_call.1} parent=1 // pred_fallthru
      _
    // Predicated region
    $region10: #{tpu_custom_call.1} parent=1 // pred_check
      _
    $region11: #{tpu_custom_call.1} parent=1 // pred_check_branch
      %22 = sbr.rel (0) target = $region13
    $region12: #{tpu_custom_call.1} parent=1 // pred_region
      %23 = dma.done [#allocation3], 64
    $region13: #{tpu_custom_call.1} parent=1 // pred_fallthru
      _
    %v24 = vld [vmem:[#allocation2] sm:$0xf]
    %v25 = vld [vmem:[%s1] sm:$0x3]
    %v27 = vlaneseq
    %v28 = vshrl.u32 %v27, 7
    %v29 = vsub.s32 0, %v28
    %v30 = vrot.slane %v25, %v29
    %v31 = vlaneseq
    %v32 = vshrl.u32 %v31, 7
    %v33 = vsub.s32 1, %v32
    %v34 = vrot.slane %v25, %v33
    %v35 = vcombine.low %v30, %v34
    %v37 = vunpack.c.l.s4 1983009808
    %v38 = vunpack.c.0.s8 %v37
    %v39 = vlaneseq
    %v40 = vshrl.u32 %v39, 7
    %v41 = vsub.s32 %v38, %v40
    %v42 = vrot.slane %v35, %v41
    %v44 = vadd.f32 %v24, %v42
    %45 = vst [vmem:[#allocation5] sm:$0xf] %v44
    // Predicated region
    $region14: #{tpu_custom_call.1} parent=1 // pred_check
      _
    $region15: #{tpu_custom_call.1} parent=1 // pred_check_branch
      %47 = sbr.rel (0) target = $region17
    $region16: #{tpu_custom_call.1} parent=1 // pred_region
      %s49 = ssub.s32 64, 64
      %50 = vsyncadd [#allocation4], %s49
      %s52 = sshll.u32 [#allocation5], 4
      %s53 = int_to_ptr.vmem [resolvable:$true] %s52
      %55 = dma.vmem_to_hbm [thread:$0]  %s53, 64, %s2, [#allocation4]
    $region17: #{tpu_custom_call.1} parent=1 // pred_fallthru
      _
    // Predicated region
    $region18: #{tpu_custom_call.1} parent=1 // pred_check
      _
    $region19: #{tpu_custom_call.1} parent=1 // pred_check_branch
      %57 = sbr.rel (0) target = $region21
    $region20: #{tpu_custom_call.1} parent=1 // pred_region
      %58 = dma.done [#allocation4], 64
    $region21: #{tpu_custom_call.1} parent=1 // pred_fallthru
      _
    %59 = vsyncpa [#allocation3], 1
    %60 = vsyncpa [#allocation4], 1

</llo_original>
